<compile_context>
chip_gen: v5e
topology: v5e:2x2
jax: 0.10.0
libtpu: 0.0.40
codegen_flags: <defaults>
</compile_context>

<pallas_src>
import functools

import jax
import jax.numpy as jnp
from jax.experimental import pallas as pl
from jax.experimental.pallas import tpu as pltpu

LANES = 128
SUBLANES = 8


def _max_block_rows():
    """Row-tile size per device generation.

    v5e has a 16 MiB default scoped-VMEM -> keep 2048 rows (1 MiB per f32
    input buffer).  v6e / v7x comfortably fit 4096-row tiles (2 MiB/buffer),
    halving per-grid-step overhead.
    """
    try:
        kind = jax.devices()[0].device_kind.lower()
    except Exception:  # pragma: no cover - defensive
        kind = ""
    return 2048 if "v5" in kind else 4096


def _tile_reduce(x_f32, block_rows):
    # (block_rows, 128) -> (8, 128): reduce over sublane groups only,
    # i.e. plain vector adds on the VPU (no XLU cross-lane work per step).
    return jnp.sum(x_f32.reshape(block_rows // SUBLANES, SUBLANES, LANES), axis=0)


def _full_loss_kernel(out_ref, gt_ref, en_ref, gn_ref, asym_ref,
                      l1_acc_ref, asym_acc_ref, *, block_rows):
    @pl.when(pl.program_id(0) == 0)
    def _():
        l1_acc_ref[...] = jnp.zeros_like(l1_acc_ref)
        asym_acc_ref[...] = jnp.zeros_like(asym_acc_ref)

    # Cast to f32 AFTER the VMEM load (inputs stream in their native dtype).
    out = out_ref[...].astype(jnp.float32)
    gt = gt_ref[...].astype(jnp.float32)
    en = en_ref[...].astype(jnp.float32)
    gn = gn_ref[...].astype(jnp.float32)
    asym = asym_ref[...].astype(jnp.float32)

    # L1 term: |out - gt|
    l1_elem = jnp.abs(out - gt)

    # asym term: if_asym * |0.25 - relu(gt_noise - est_noise)| * (est - gt)^2
    nd = gn - en                       # relu(nd) reused; nd*nd == (est - gt)^2
    asym_elem = asym * jnp.abs(0.25 - jnp.maximum(nd, 0.0)) * (nd * nd)

    l1_acc_ref[...] += _tile_reduce(l1_elem, block_rows)
    asym_acc_ref[...] += _tile_reduce(asym_elem, block_rows)


def _l1_only_kernel(out_ref, gt_ref, l1_acc_ref, *, block_rows):
    @pl.when(pl.program_id(0) == 0)
    def _():
        l1_acc_ref[...] = jnp.zeros_like(l1_acc_ref)

    l1_elem = jnp.abs(out_ref[...].astype(jnp.float32)
                      - gt_ref[...].astype(jnp.float32))
    l1_acc_ref[...] += _tile_reduce(l1_elem, block_rows)


def _to_slab(t, kernel_rows, main_elems):
    """Native-dtype [kernel_rows, 128] slab; contiguous reshape (free).

    When main_elems < t.size only the aligned prefix is taken; the small
    remainder is reduced in plain JAX by the wrapper (no jnp.pad HBM copy).
    """
    flat = jnp.reshape(t, (-1,))
    if main_elems != flat.shape[0]:
        flat = flat[:main_elems]
    return flat.reshape(kernel_rows, LANES)


def _run_reduction(kernel_fn, slabs, n_outputs, block_rows, num_tiles):
    in_spec = pl.BlockSpec((block_rows, LANES), lambda i: (i, 0))
    out_spec = pl.BlockSpec((SUBLANES, LANES), lambda i: (0, 0))
    out_shape = jax.ShapeDtypeStruct((SUBLANES, LANES), jnp.float32)

    # Double-buffered input bytes; raise the scoped-VMEM limit only when the
    # 4096-row tiles would exceed the most conservative (v5e, 16 MiB) default.
    buf_bytes = sum(2 * block_rows * LANES * s.dtype.itemsize for s in slabs)
    params = {"dimension_semantics": ("arbitrary",)}
    if buf_bytes > (12 << 20):
        params["vmem_limit_bytes"] = buf_bytes + (8 << 20)

    kern = functools.partial(kernel_fn, block_rows=block_rows)
    return pl.pallas_call(
        kern,
        out_shape=tuple([out_shape] * n_outputs),
        grid_spec=pltpu.PrefetchScalarGridSpec(
            num_scalar_prefetch=0,
            grid=(num_tiles,),
            in_specs=[in_spec] * len(slabs),
            out_specs=tuple([out_spec] * n_outputs),
        ),
        compiler_params=pltpu.CompilerParams(**params),
    )(*slabs)


def _tail_sums(tensors, start, need_asym):
    """Plain-JAX partial sums over the ragged tail (elements [start:])."""
    out_t, gt_t, en_t, gn_t, asym_t = tensors
    o = out_t.reshape(-1)[start:].astype(jnp.float32)
    g = gt_t.reshape(-1)[start:].astype(jnp.float32)
    l1 = jnp.sum(jnp.abs(o - g))
    if not need_asym:
        return l1, jnp.float32(0.0)
    en = en_t.reshape(-1)[start:].astype(jnp.float32)
    gn = gn_t.reshape(-1)[start:].astype(jnp.float32)
    am = asym_t.reshape(-1)[start:].astype(jnp.float32)
    nd = gn - en
    asym = jnp.sum(am * jnp.abs(0.25 - jnp.maximum(nd, 0.0)) * (nd * nd))
    return l1, asym


@functools.partial(jax.jit, static_argnames=("epoch",))
def fixed_loss(out_image, gt_image, est_noise, gt_noise, if_asym, *, epoch):
    """Pallas TPU implementation of fixed_loss.forward.

    Note: the PyTorch module computes l2_loss (MSE) but never uses it
    (L_loss = l1_loss), so it is intentionally omitted here (dead code).
    """
    # epoch -> static scalar weight `a` (Python control flow, matches PyTorch)
    if epoch <= 1500:
        a = 1.0
    elif epoch <= 1700:
        a = 0.7
    elif epoch <= 1900:
        a = 0.4
    else:
        a = 0.0

    n = out_image.size
    inv_n = 1.0 / float(n)
    all_tensors = (out_image, gt_image, est_noise, gt_noise, if_asym)

    # Static tiling: kernel covers only FULL tiles (exact coverage, no mask
    # needed); the remainder (< one tile) is reduced in plain JAX below.
    rows_total = n // LANES
    usable_rows = (rows_total // SUBLANES) * SUBLANES
    if usable_rows > 0:
        block_rows = min(_max_block_rows(), usable_rows)
        num_tiles = usable_rows // block_rows
    else:
        block_rows, num_tiles = 0, 0
    kernel_rows = num_tiles * block_rows
    main_elems = kernel_rows * LANES
    use_kernel = num_tiles > 0

    if a == 0.0:
        # asym term is weighted by 0: only read the 2 streams that matter.
        if use_kernel:
            slabs = [_to_slab(t, kernel_rows, main_elems)
                     for t in (out_image, gt_image)]
            (l1_part,) = _run_reduction(_l1_only_kernel, slabs, 1,
                                        block_rows, num_tiles)
            l1_sum = jnp.sum(l1_part)
        else:
            l1_sum = jnp.float32(0.0)
        if main_elems < n:
            t_l1, _ = _tail_sums(all_tensors, main_elems, need_asym=False)
            l1_sum = l1_sum + t_l1
        return l1_sum * inv_n

    if use_kernel:
        slabs = [_to_slab(t, kernel_rows, main_elems) for t in all_tensors]
        l1_part, asym_part = _run_reduction(_full_loss_kernel, slabs, 2,
                                            block_rows, num_tiles)
        l1_sum = jnp.sum(l1_part)
        asym_sum = jnp.sum(asym_part)
    else:
        l1_sum = jnp.float32(0.0)
        asym_sum = jnp.float32(0.0)
    if main_elems < n:
        t_l1, t_asym = _tail_sums(all_tensors, main_elems, need_asym=True)
        l1_sum = l1_sum + t_l1
        asym_sum = asym_sum + t_asym

    return l1_sum * inv_n + 0.5 * a * (asym_sum * inv_n)


def _ref_loss(out_image, gt_image, est_noise, gt_noise, if_asym, epoch):
    if epoch <= 1500:
        a = 1.0
    elif epoch <= 1700:
        a = 0.7
    elif epoch <= 1900:
        a = 0.4
    else:
        a = 0.0
    l1 = jnp.mean(jnp.abs(out_image - gt_image))
    asym = jnp.mean(if_asym
                    * jnp.abs(0.25 - jax.nn.relu(gt_noise - est_noise))
                    * (est_noise - gt_noise) ** 2)
    return l1 + 0.5 * a * asym


if __name__ == "__main__":
    key = jax.random.PRNGKey(0)
    k1, k2, k3, k4, k5 = jax.random.split(key, 5)
    B, C, H, W = 2, 4, 16, 16   # NCHW, matching the PyTorch convention
    out_image = jax.random.normal(k1, (B, C, H, W), jnp.float32)
    gt_image = jax.random.normal(k2, (B, C, H, W), jnp.float32)
    est_noise = jax.random.normal(k3, (B, C, H, W), jnp.float32) * 0.1
    gt_noise = jax.random.normal(k4, (B, C, H, W), jnp.float32) * 0.1
    if_asym = (jax.random.uniform(k5, (B, C, H, W)) > 0.5).astype(jnp.float32)

    # Full path (a = 0.7)
    loss = fixed_loss(out_image, gt_image, est_noise, gt_noise, if_asym,
                      epoch=1600)
    jax.block_until_ready(loss)
    ref = _ref_loss(out_image, gt_image, est_noise, gt_noise, if_asym, 1600)
    assert jnp.allclose(loss, ref, rtol=1e-5, atol=1e-6), (loss, ref)

    # L1-only fast path (a = 0, epoch > 1900)
    loss0 = fixed_loss(out_image, gt_image, est_noise, gt_noise, if_asym,
                       epoch=2000)
    jax.block_until_ready(loss0)
    ref0 = _ref_loss(out_image, gt_image, est_noise, gt_noise, if_asym, 2000)
    assert jnp.allclose(loss0, ref0, rtol=1e-5, atol=1e-6), (loss0, ref0)

    print("KERNEL_OK")
</pallas_src>

<mosaic_0001>
module attributes {stable_mosaic.version = 11 : i64} {
  func.func @_full_loss_kernel(%arg0: i32, %arg1: memref<16x128xf32, #tpu.memory_space<vmem>>, %arg2: memref<16x128xf32, #tpu.memory_space<vmem>>, %arg3: memref<16x128xf32, #tpu.memory_space<vmem>>, %arg4: memref<16x128xf32, #tpu.memory_space<vmem>>, %arg5: memref<16x128xf32, #tpu.memory_space<vmem>>, %arg6: memref<8x128xf32, #tpu.memory_space<vmem>>, %arg7: memref<8x128xf32, #tpu.memory_space<vmem>>) attributes {dimension_semantics = [#tpu.dimension_semantics<arbitrary>], iteration_bounds = array<i64: 1>, scalar_prefetch = 0 : i64, scratch_operands = 0 : i64, tpu.core_type = #tpu.core_type<tc>, window_params = [{transform_indices = @transform_0, window_bounds = array<i64: 16, 128>}, {transform_indices = @transform_1, window_bounds = array<i64: 16, 128>}, {transform_indices = @transform_2, window_bounds = array<i64: 16, 128>}, {transform_indices = @transform_3, window_bounds = array<i64: 16, 128>}, {transform_indices = @transform_4, window_bounds = array<i64: 16, 128>}, {pipeline_mode = #tpu.pipeline_mode<synchronous>, transform_indices = @transform_5, window_bounds = array<i64: 8, 128>}, {pipeline_mode = #tpu.pipeline_mode<synchronous>, transform_indices = @transform_6, window_bounds = array<i64: 8, 128>}]} {
    %c0_i32 = arith.constant 0 : i32
    %0 = arith.cmpi eq, %arg0, %c0_i32 : i32
    %1 = arith.extui %0 : i1 to i32
    %c0_i32_0 = arith.constant 0 : i32
    %2 = arith.cmpi ne, %1, %c0_i32_0 : i32
    scf.if %2 {
      %cst_21 = arith.constant 0.000000e+00 : f32
      %29 = vector.broadcast %cst_21 : f32 to vector<8x128xf32>
      %c0_22 = arith.constant 0 : index
      %c0_23 = arith.constant 0 : index
      %30 = vector.load %arg6[%c0_22, %c0_23] : memref<8x128xf32, #tpu.memory_space<vmem>>, vector<8x128xf32>
      tpu.vector_store %arg6[%c0_22, %c0_23], %29 {strides = array<i32>} : memref<8x128xf32, #tpu.memory_space<vmem>>, vector<8x128xf32>,
      %cst_24 = arith.constant 0.000000e+00 : f32
      %31 = vector.broadcast %cst_24 : f32 to vector<8x128xf32>
      %c0_25 = arith.constant 0 : index
      %c0_26 = arith.constant 0 : index
      %32 = vector.load %arg7[%c0_25, %c0_26] : memref<8x128xf32, #tpu.memory_space<vmem>>, vector<8x128xf32>
      tpu.vector_store %arg7[%c0_25, %c0_26], %31 {strides = array<i32>} : memref<8x128xf32, #tpu.memory_space<vmem>>, vector<8x128xf32>,
    } else {
    }
    %c0 = arith.constant 0 : index
    %c0_1 = arith.constant 0 : index
    %3 = vector.load %arg1[%c0, %c0_1] : memref<16x128xf32, #tpu.memory_space<vmem>>, vector<16x128xf32>
    %c0_2 = arith.constant 0 : index
    %c0_3 = arith.constant 0 : index
    %4 = vector.load %arg2[%c0_2, %c0_3] : memref<16x128xf32, #tpu.memory_space<vmem>>, vector<16x128xf32>
    %c0_4 = arith.constant 0 : index
    %c0_5 = arith.constant 0 : index
    %5 = vector.load %arg3[%c0_4, %c0_5] : memref<16x128xf32, #tpu.memory_space<vmem>>, vector<16x128xf32>
    %c0_6 = arith.constant 0 : index
    %c0_7 = arith.constant 0 : index
    %6 = vector.load %arg4[%c0_6, %c0_7] : memref<16x128xf32, #tpu.memory_space<vmem>>, vector<16x128xf32>
    %c0_8 = arith.constant 0 : index
    %c0_9 = arith.constant 0 : index
    %7 = vector.load %arg5[%c0_8, %c0_9] : memref<16x128xf32, #tpu.memory_space<vmem>>, vector<16x128xf32>
    %8 = arith.subf %3, %4 : vector<16x128xf32>
    %9 = math.absf %8 : vector<16x128xf32>
    %10 = arith.subf %6, %5 : vector<16x128xf32>
    %cst = arith.constant 0.000000e+00 : f32
    %11 = vector.broadcast %cst : f32 to vector<16x128xf32>
    %12 = arith.maximumf %10, %11 : vector<16x128xf32>
    %cst_10 = arith.constant 2.500000e-01 : f32
    %13 = vector.broadcast %cst_10 : f32 to vector<16x128xf32>
    %14 = arith.subf %13, %12 : vector<16x128xf32>
    %15 = math.absf %14 : vector<16x128xf32>
    %16 = arith.mulf %7, %15 : vector<16x128xf32>
    %17 = arith.mulf %10, %10 : vector<16x128xf32>
    %18 = arith.mulf %16, %17 : vector<16x128xf32>
    %c0_11 = arith.constant 0 : index
    %c0_12 = arith.constant 0 : index
    %19 = vector.load %arg6[%c0_11, %c0_12] : memref<8x128xf32, #tpu.memory_space<vmem>>, vector<8x128xf32>
    %20 = vector.shape_cast %9 : vector<16x128xf32> to vector<2x8x128xf32>
    %cst_13 = arith.constant dense<0.000000e+00> : vector<8x128xf32>
    %21 = vector.multi_reduction <add>, %20, %cst_13 [0] : vector<2x8x128xf32> to vector<8x128xf32>
    %22 = arith.addf %19, %21 : vector<8x128xf32>
    %c0_14 = arith.constant 0 : index
    %c0_15 = arith.constant 0 : index
    %23 = vector.load %arg6[%c0_14, %c0_15] : memref<8x128xf32, #tpu.memory_space<vmem>>, vector<8x128xf32>
    tpu.vector_store %arg6[%c0_14, %c0_15], %22 {strides = array<i32>} : memref<8x128xf32, #tpu.memory_space<vmem>>, vector<8x128xf32>,
    %c0_16 = arith.constant 0 : index
    %c0_17 = arith.constant 0 : index
    %24 = vector.load %arg7[%c0_16, %c0_17] : memref<8x128xf32, #tpu.memory_space<vmem>>, vector<8x128xf32>
    %25 = vector.shape_cast %18 : vector<16x128xf32> to vector<2x8x128xf32>
    %cst_18 = arith.constant dense<0.000000e+00> : vector<8x128xf32>
    %26 = vector.multi_reduction <add>, %25, %cst_18 [0] : vector<2x8x128xf32> to vector<8x128xf32>
    %27 = arith.addf %24, %26 : vector<8x128xf32>
    %c0_19 = arith.constant 0 : index
    %c0_20 = arith.constant 0 : index
    %28 = vector.load %arg7[%c0_19, %c0_20] : memref<8x128xf32, #tpu.memory_space<vmem>>, vector<8x128xf32>
    tpu.vector_store %arg7[%c0_19, %c0_20], %27 {strides = array<i32>} : memref<8x128xf32, #tpu.memory_space<vmem>>, vector<8x128xf32>,
    return
  }
  func.func @transform_0(%arg0: i32) -> (i32, i32) {
    %c0_i32 = arith.constant 0 : i32
    %c0_i32_0 = arith.constant 0 : i32
    return %arg0, %c0_i32 : i32, i32
  }
  func.func @transform_1(%arg0: i32) -> (i32, i32) {
    %c0_i32 = arith.constant 0 : i32
    %c0_i32_0 = arith.constant 0 : i32
    return %arg0, %c0_i32 : i32, i32
  }
  func.func @transform_2(%arg0: i32) -> (i32, i32) {
    %c0_i32 = arith.constant 0 : i32
    %c0_i32_0 = arith.constant 0 : i32
    return %arg0, %c0_i32 : i32, i32
  }
  func.func @transform_3(%arg0: i32) -> (i32, i32) {
    %c0_i32 = arith.constant 0 : i32
    %c0_i32_0 = arith.constant 0 : i32
    return %arg0, %c0_i32 : i32, i32
  }
  func.func @transform_4(%arg0: i32) -> (i32, i32) {
    %c0_i32 = arith.constant 0 : i32
    %c0_i32_0 = arith.constant 0 : i32
    return %arg0, %c0_i32 : i32, i32
  }
  func.func @transform_5(%arg0: i32) -> (i32, i32) {
    %c0_i32 = arith.constant 0 : i32
    %c0_i32_0 = arith.constant 0 : i32
    %c0_i32_1 = arith.constant 0 : i32
    return %c0_i32, %c0_i32_0 : i32, i32
  }
  func.func @transform_6(%arg0: i32) -> (i32, i32) {
    %c0_i32 = arith.constant 0 : i32
    %c0_i32_0 = arith.constant 0 : i32
    %c0_i32_1 = arith.constant 0 : i32
    return %c0_i32, %c0_i32_0 : i32, i32
  }
}

</mosaic_0001>

<llo_original>
// kernel: fixed_loss.1
$region0: #{fixed_loss.1}
  #allocation0 [shape = 'u32[]', space=smem, size = 0x4, offset = 0x4, fixed_abs, tag = 'smem constant byte address 0x4 - core index']
  #allocation1 [shape = 'u32[72,128]{1,0:T(1,128)}', space=vmem, size = 0x9000, scoped, tag = 'internal scratch']
  %s0 = inlined_call_operand.vmem [shape: f32[16,128], index: 0, kind: input, shape index: {}]
  %s1 = inlined_call_operand.vmem [shape: f32[16,128], index: 1, kind: input, shape index: {}]
  %s2 = inlined_call_operand.vmem [shape: f32[16,128], index: 2, kind: input, shape index: {}]
  %s3 = inlined_call_operand.vmem [shape: f32[16,128], index: 3, kind: input, shape index: {}]
  %s4 = inlined_call_operand.vmem [shape: f32[16,128], index: 4, kind: input, shape index: {}]
  %s5 = inlined_call_operand.vmem [shape: f32[8,128], index: 5, kind: output, shape index: {0}]
  %s6 = inlined_call_operand.vmem [shape: f32[8,128], index: 6, kind: output, shape index: {1}]
  %7 = xla_tuple %s5, %s6
  %s8 = sld [smem:[#allocation0]]
  $region42: #{fixed_loss.1} parent=0
    _
  %s10 = ssub.s32 1, %s8
  %s11 = scalar_select 0, %s10, %s8
  // Predicated region
  $region2: #{fixed_loss.1} parent=0 // pred_check
    _
  $region3: #{fixed_loss.1} parent=0 // pred_check_branch
    %13 = sbr.rel (0) target = $region5
  $region4: #{fixed_loss.1} parent=0 // pred_region
    _
  $region5: #{fixed_loss.1} parent=0 // pred_fallthru
    _
  // Predicated region
  $region6: #{fixed_loss.1} parent=0 // pred_check
    _
  $region7: #{fixed_loss.1} parent=0 // pred_check_branch
    %15 = sbr.rel (0) target = $region9
  $region8: #{fixed_loss.1} parent=0 // pred_region
    _
  $region9: #{fixed_loss.1} parent=0 // pred_fallthru
    _
  // Predicated region
  $region10: #{fixed_loss.1} parent=0 // pred_check
    _
  $region11: #{fixed_loss.1} parent=0 // pred_check_branch
    %17 = sbr.rel (0) target = $region13
  $region12: #{fixed_loss.1} parent=0 // pred_region
    _
  $region13: #{fixed_loss.1} parent=0 // pred_fallthru
    _
  // Predicated region
  $region14: #{fixed_loss.1} parent=0 // pred_check
    _
  $region15: #{fixed_loss.1} parent=0 // pred_check_branch
    %19 = sbr.rel (0) target = $region17
  $region16: #{fixed_loss.1} parent=0 // pred_region
    _
  $region17: #{fixed_loss.1} parent=0 // pred_fallthru
    _
  // Predicated region
  $region18: #{fixed_loss.1} parent=0 // pred_check
    _
  $region19: #{fixed_loss.1} parent=0 // pred_check_branch
    %21 = sbr.rel (0) target = $region21
  $region20: #{fixed_loss.1} parent=0 // pred_region
    _
  $region21: #{fixed_loss.1} parent=0 // pred_fallthru
    _
  %p22 = scmp.eq.s32.totalorder 0, 0
  // Predicated region
  $region22: #{fixed_loss.1} parent=0 // pred_check
    %p23 = pneg %p22
  $region23: #{fixed_loss.1} parent=0 // pred_check_branch
    %25 = sbr.rel (%p23) target = $region25
  $region24: #{fixed_loss.1} parent=0 // pred_region
    %26 = vst [vmem:[%s5] sm:$0xff] 0.0
    %27 = vst [vmem:[%s6] sm:$0xff] 0.0
  $region25: #{fixed_loss.1} parent=0 // pred_fallthru
    _
  %v28 = vld [vmem:[%s0] sm:$0xff]
  %v29 = vld [vmem:[%s0 + $0x8] sm:$0xff]
  %v30 = vld [vmem:[%s1] sm:$0xff]
  %v31 = vld [vmem:[%s1 + $0x8] sm:$0xff]
  %v32 = vld [vmem:[%s2] sm:$0xff]
  %v33 = vld [vmem:[%s2 + $0x8] sm:$0xff]
  %v34 = vld [vmem:[%s3] sm:$0xff]
  %v35 = vld [vmem:[%s3 + $0x8] sm:$0xff]
  %v36 = vld [vmem:[%s4] sm:$0xff]
  %v37 = vld [vmem:[%s4 + $0x8] sm:$0xff]
  %v38 = vsub.f32 %v28, %v30
  %v39 = vsub.f32 %v29, %v31
  %v40 = vand.u32 2147483647, %v38
  %v41 = vand.u32 2147483647, %v39
  %v42 = vsub.f32 %v34, %v32
  %v43 = vsub.f32 %v35, %v33
  %v44 = vmax.f32 %v42, 0.0
  %v45 = vmax.f32 %v43, 0.0
  %v46 = vsub.f32 0.25, %v44
  %v47 = vsub.f32 0.25, %v45
  %v48 = vand.u32 2147483647, %v46
  %v49 = vand.u32 2147483647, %v47
  %v50 = vmul.f32 %v36, %v48
  %v51 = vmul.f32 %v37, %v49
  %v52 = vmul.f32 %v42, %v42
  %v53 = vmul.f32 %v43, %v43
  %v54 = vmul.f32 %v50, %v52
  %v55 = vmul.f32 %v51, %v53
  %v56 = vld [vmem:[%s5] sm:$0xff]
  %v57 = vadd.f32 %v40, %v41
  %v58 = vadd.f32 %v56, %v57
  %59 = vst [vmem:[%s5] sm:$0xff] %v58
  %v60 = vld [vmem:[%s6] sm:$0xff]
  %v61 = vadd.f32 %v54, %v55
  %v62 = vadd.f32 %v60, %v61
  %63 = vst [vmem:[%s6] sm:$0xff] %v62
  // Predicated region
  $region26: #{fixed_loss.1} parent=0 // pred_check
    _
  $region27: #{fixed_loss.1} parent=0 // pred_check_branch
    %65 = sbr.rel (0) target = $region29
  $region28: #{fixed_loss.1} parent=0 // pred_region
    _
  $region29: #{fixed_loss.1} parent=0 // pred_fallthru
    _
  // Predicated region
  $region30: #{fixed_loss.1} parent=0 // pred_check
    _
  $region31: #{fixed_loss.1} parent=0 // pred_check_branch
    %67 = sbr.rel (0) target = $region33
  $region32: #{fixed_loss.1} parent=0 // pred_region
    _
  $region33: #{fixed_loss.1} parent=0 // pred_fallthru
    _
  // Predicated region
  $region34: #{fixed_loss.1} parent=0 // pred_check
    _
  $region35: #{fixed_loss.1} parent=0 // pred_check_branch
    %69 = sbr.rel (0) target = $region37
  $region36: #{fixed_loss.1} parent=0 // pred_region
    _
  $region37: #{fixed_loss.1} parent=0 // pred_fallthru
    _
  // Predicated region
  $region38: #{fixed_loss.1} parent=0 // pred_check
    _
  $region39: #{fixed_loss.1} parent=0 // pred_check_branch
    %71 = sbr.rel (0) target = $region41
  $region40: #{fixed_loss.1} parent=0 // pred_region
    _
  $region41: #{fixed_loss.1} parent=0 // pred_fallthru
    _

</llo_original>
